<compile_context>
chip_gen: v7x
topology: tpu7x:2x2x1
jax: 0.10.0
libtpu: 0.0.40
codegen_flags: <defaults>
</compile_context>

<pallas_src>
import jax
import jax.numpy as jnp
from jax.experimental import pallas as pl
from jax.experimental.pallas import tpu as pltpu

ALPHA = 0.25
GAMMA = 2.0            # statically 2 -> lowered as explicit squaring in-kernel
WEIGHTS = (1.0, 1.0)

_NEG_PAD = -1e30       # finite "minus infinity" for T padding (max-safe, NaN-free)


def _round_up(x, m):
    return ((x + m - 1) // m) * m


def _focal_sum(x, t):
    """Sum over all elements of the focal-weighted BCE-with-logits loss."""
    e = jnp.exp(-jnp.abs(x))                                  # single EUP exp / element
    bce = jnp.maximum(x, 0.0) - x * t + jnp.log1p(e)          # BCEWithLogitsLoss(reduction='none')
    inv = pl.reciprocal(1.0 + e, approx=True)                 # EUP vrcp (separate issue slot)
    p = jnp.where(x >= 0.0, inv, e * inv)                     # sigmoid(x), reuses e
    q = 1.0 - p
    loss = t * ALPHA * (q * q) * bce + (1.0 - t) * (p * p) * bce
    return jnp.sum(loss)


def _make_kernel(inv_mean_scale):
    def kernel(logit_ref, target_ref, frame_ref, out_ref, max_scr):
        t_idx = pl.program_id(1)
        n_t = pl.num_programs(1)

        # Running max over the (tiled) T axis  == torch framewise.max(dim=1).
        frame = frame_ref[...].astype(jnp.float32)            # (TB, TT, C), cast after DMA
        tile_max = jnp.max(frame, axis=1)                     # (TB, C)

        @pl.when(t_idx == 0)
        def _():
            max_scr[...] = tile_max

        @pl.when(t_idx > 0)
        def _():
            max_scr[...] = jnp.maximum(max_scr[...], tile_max)

        # Finalize once per B-tile: both focal terms + weights + mean scale.
        @pl.when(t_idx == n_t - 1)
        def _():
            logit = logit_ref[...]
            target = target_ref[...]
            loss_sum = _focal_sum(logit, target)
            aux_sum = _focal_sum(max_scr[...], target)
            val = (WEIGHTS[0] * loss_sum + WEIGHTS[1] * aux_sum) * inv_mean_scale
            out_ref[...] = jnp.full(out_ref.shape, val, dtype=jnp.float32)

    return kernel


def bce_focal_2way_loss(logit, framewise_logit, target, *, tt_target=512):
    """BCEFocal2WayLoss forward. Returns a scalar f32 loss."""
    B, C = logit.shape
    _, T, _ = framewise_logit.shape

    logit = logit.astype(jnp.float32)
    target = target.astype(jnp.float32)
    # framewise_logit keeps its native dtype; cast happens inside the kernel.

    # --- tile sizes ----------------------------------------------------------
    # B tile: multiple of 8 when possible (several "parallel" B tiles for the
    # v7x dual TensorCore), otherwise the full (small) batch as one tile.
    tb = 8 if (B >= 8 and B % 8 == 0) else B
    nb = B // tb

    # T tile: multiple of 8 (sublane constraint on the framewise block); padded
    # T positions are filled with a large negative value so the max is exact.
    tt = min(tt_target, _round_up(T, 8))
    t_pad = _round_up(T, tt)
    nt = t_pad // tt
    if t_pad != T:
        framewise_logit = jnp.pad(
            framewise_logit, ((0, 0), (0, t_pad - T), (0, 0)),
            constant_values=_NEG_PAD)

    inv_mean_scale = 1.0 / float(B * C)
    kernel = _make_kernel(inv_mean_scale)

    partial = pl.pallas_call(
        kernel,
        out_shape=jax.ShapeDtypeStruct((nb, 8, 128), jnp.float32),
        grid_spec=pltpu.PrefetchScalarGridSpec(
            num_scalar_prefetch=0,
            grid=(nb, nt),
            in_specs=[
                pl.BlockSpec((tb, C), lambda b, t: (b, 0)),           # logit
                pl.BlockSpec((tb, C), lambda b, t: (b, 0)),           # target
                pl.BlockSpec((tb, tt, C), lambda b, t: (b, t, 0)),    # framewise
            ],
            out_specs=pl.BlockSpec((1, 8, 128), lambda b, t: (b, 0, 0)),
            scratch_shapes=[pltpu.VMEM((tb, C), jnp.float32)],        # running max
        ),
        compiler_params=pltpu.CompilerParams(
            dimension_semantics=("parallel", "arbitrary")),
    )(logit, target, framewise_logit)

    # Tiny cross-B-tile reduction (nb scalars) outside the kernel so the B grid
    # axis can stay "parallel".
    return jnp.sum(partial[:, 0, 0])


def _reference(logit, framewise_logit, target):
    """Pure-JAX reference mirroring the PyTorch module exactly."""
    target = target.astype(jnp.float32)

    def focal_mean(x, t):
        bce = jnp.maximum(x, 0.0) - x * t + jnp.log1p(jnp.exp(-jnp.abs(x)))
        p = jax.nn.sigmoid(x)
        loss = t * ALPHA * (1.0 - p) ** GAMMA * bce + (1.0 - t) * p ** GAMMA * bce
        return jnp.mean(loss)

    clip_max = jnp.max(framewise_logit.astype(jnp.float32), axis=1)
    return (WEIGHTS[0] * focal_mean(logit.astype(jnp.float32), target)
            + WEIGHTS[1] * focal_mean(clip_max, target))


if __name__ == "__main__":
    key = jax.random.PRNGKey(0)
    k1, k2, k3 = jax.random.split(key, 3)

    B, T, C = 2, 8, 32
    logit = jax.random.normal(k1, (B, C), dtype=jnp.float32)
    framewise_logit = jax.random.normal(k2, (B, T, C), dtype=jnp.float32)
    target = (jax.random.uniform(k3, (B, C)) > 0.7).astype(jnp.float32)

    out = jax.block_until_ready(bce_focal_2way_loss(logit, framewise_logit, target))
    ref = _reference(logit, framewise_logit, target)

    # Tolerance accounts for the approximate EUP reciprocal used for sigmoid.
    assert jnp.allclose(out, ref, atol=2e-3, rtol=2e-3), (out, ref)

    print("KERNEL_OK")
</pallas_src>

<mosaic_0001>
module attributes {stable_mosaic.version = 11 : i64} {
  func.func @kernel(%arg0: i32, %arg1: i32, %arg2: memref<2x32xf32, #tpu.memory_space<vmem>>, %arg3: memref<2x32xf32, #tpu.memory_space<vmem>>, %arg4: memref<2x8x32xf32, #tpu.memory_space<vmem>>, %arg5: memref<1x8x128xf32, #tpu.memory_space<vmem>>, %arg6: memref<2x32xf32, #tpu.memory_space<vmem>>) attributes {dimension_semantics = [#tpu.dimension_semantics<parallel>, #tpu.dimension_semantics<arbitrary>], iteration_bounds = array<i64: 1, 1>, scalar_prefetch = 0 : i64, scratch_operands = 1 : i64, tpu.core_type = #tpu.core_type<tc>, window_params = [{transform_indices = @transform_0, window_bounds = array<i64: 2, 32>}, {transform_indices = @transform_1, window_bounds = array<i64: 2, 32>}, {transform_indices = @transform_2, window_bounds = array<i64: 2, 8, 32>}, {transform_indices = @transform_3, window_bounds = array<i64: 1, 8, 128>}]} {
    %c0 = arith.constant 0 : index
    %c0_0 = arith.constant 0 : index
    %c0_1 = arith.constant 0 : index
    %0 = vector.load %arg4[%c0, %c0_0, %c0_1] : memref<2x8x32xf32, #tpu.memory_space<vmem>>, vector<2x8x32xf32>
    %cst = arith.constant dense<0xFF800000> : vector<2x32xf32>
    %1 = vector.multi_reduction <maximumf>, %0, %cst [1] : vector<2x8x32xf32> to vector<2x32xf32>
    %c0_i32 = arith.constant 0 : i32
    %2 = arith.cmpi eq, %arg1, %c0_i32 : i32
    %3 = arith.extui %2 : i1 to i32
    %c0_i32_2 = arith.constant 0 : i32
    %4 = arith.cmpi ne, %3, %c0_i32_2 : i32
    scf.if %4 {
      %c0_7 = arith.constant 0 : index
      %c0_8 = arith.constant 0 : index
      %11 = vector.load %arg6[%c0_7, %c0_8] : memref<2x32xf32, #tpu.memory_space<vmem>>, vector<2x32xf32>
      tpu.vector_store %arg6[%c0_7, %c0_8], %1 {strides = array<i32>} : memref<2x32xf32, #tpu.memory_space<vmem>>, vector<2x32xf32>,
    } else {
    }
    %c0_i32_3 = arith.constant 0 : i32
    %5 = arith.cmpi sgt, %arg1, %c0_i32_3 : i32
    %6 = arith.extui %5 : i1 to i32
    %c0_i32_4 = arith.constant 0 : i32
    %7 = arith.cmpi ne, %6, %c0_i32_4 : i32
    scf.if %7 {
      %c0_7 = arith.constant 0 : index
      %c0_8 = arith.constant 0 : index
      %11 = vector.load %arg6[%c0_7, %c0_8] : memref<2x32xf32, #tpu.memory_space<vmem>>, vector<2x32xf32>
      %12 = arith.maximumf %11, %1 : vector<2x32xf32>
      %c0_9 = arith.constant 0 : index
      %c0_10 = arith.constant 0 : index
      %13 = vector.load %arg6[%c0_9, %c0_10] : memref<2x32xf32, #tpu.memory_space<vmem>>, vector<2x32xf32>
      tpu.vector_store %arg6[%c0_9, %c0_10], %12 {strides = array<i32>} : memref<2x32xf32, #tpu.memory_space<vmem>>, vector<2x32xf32>,
    } else {
    }
    %c0_i32_5 = arith.constant 0 : i32
    %8 = arith.cmpi eq, %arg1, %c0_i32_5 : i32
    %9 = arith.extui %8 : i1 to i32
    %c0_i32_6 = arith.constant 0 : i32
    %10 = arith.cmpi ne, %9, %c0_i32_6 : i32
    scf.if %10 {
      %c0_7 = arith.constant 0 : index
      %c0_8 = arith.constant 0 : index
      %11 = vector.load %arg2[%c0_7, %c0_8] : memref<2x32xf32, #tpu.memory_space<vmem>>, vector<2x32xf32>
      %c0_9 = arith.constant 0 : index
      %c0_10 = arith.constant 0 : index
      %12 = vector.load %arg3[%c0_9, %c0_10] : memref<2x32xf32, #tpu.memory_space<vmem>>, vector<2x32xf32>
      %13 = math.absf %11 : vector<2x32xf32>
      %cst_11 = arith.constant 0.000000e+00 : f32
      %14 = vector.broadcast %cst_11 : f32 to vector<2x32xf32>
      %15 = arith.subf %14, %13 : vector<2x32xf32>
      %16 = math.exp %15 : vector<2x32xf32>
      %cst_12 = arith.constant 0.000000e+00 : f32
      %17 = vector.broadcast %cst_12 : f32 to vector<2x32xf32>
      %18 = arith.maximumf %11, %17 : vector<2x32xf32>
      %19 = arith.mulf %11, %12 : vector<2x32xf32>
      %20 = arith.subf %18, %19 : vector<2x32xf32>
      %21 = math.log1p %16 : vector<2x32xf32>
      %22 = arith.addf %20, %21 : vector<2x32xf32>
      %cst_13 = arith.constant 1.000000e+00 : f32
      %23 = vector.broadcast %cst_13 : f32 to vector<2x32xf32>
      %24 = arith.addf %23, %16 : vector<2x32xf32>
      %25 = tpu.reciprocal %24 {approx = true} : vector<2x32xf32> -> vector<2x32xf32>
      %cst_14 = arith.constant 0.000000e+00 : f32
      %26 = vector.broadcast %cst_14 : f32 to vector<2x32xf32>
      %27 = arith.cmpf oge, %11, %26 : vector<2x32xf32>
      %28 = arith.mulf %16, %25 : vector<2x32xf32>
      %29 = arith.select %27, %25, %28 : vector<2x32xi1>, vector<2x32xf32>
      %cst_15 = arith.constant 1.000000e+00 : f32
      %30 = vector.broadcast %cst_15 : f32 to vector<2x32xf32>
      %31 = arith.subf %30, %29 : vector<2x32xf32>
      %cst_16 = arith.constant 2.500000e-01 : f32
      %32 = vector.broadcast %cst_16 : f32 to vector<2x32xf32>
      %33 = arith.mulf %12, %32 : vector<2x32xf32>
      %34 = arith.mulf %31, %31 : vector<2x32xf32>
      %35 = arith.mulf %33, %34 : vector<2x32xf32>
      %36 = arith.mulf %35, %22 : vector<2x32xf32>
      %cst_17 = arith.constant 1.000000e+00 : f32
      %37 = vector.broadcast %cst_17 : f32 to vector<2x32xf32>
      %38 = arith.subf %37, %12 : vector<2x32xf32>
      %39 = arith.mulf %29, %29 : vector<2x32xf32>
      %40 = arith.mulf %38, %39 : vector<2x32xf32>
      %41 = arith.mulf %40, %22 : vector<2x32xf32>
      %42 = arith.addf %36, %41 : vector<2x32xf32>
      %43 = vector.shape_cast %42 : vector<2x32xf32> to vector<1x2x32xf32>
      %cst_18 = arith.constant dense<0.000000e+00> : vector<1xf32>
      %44 = vector.multi_reduction <add>, %43, %cst_18 [1, 2] : vector<1x2x32xf32> to vector<1xf32>
      %45 = vector.shape_cast %44 : vector<1xf32> to vector<1x1x1xf32>
      %46 = vector.extract %45[0, 0, 0] : f32 from vector<1x1x1xf32>
      %c0_19 = arith.constant 0 : index
      %c0_20 = arith.constant 0 : index
      %47 = vector.load %arg6[%c0_19, %c0_20] : memref<2x32xf32, #tpu.memory_space<vmem>>, vector<2x32xf32>
      %48 = math.absf %47 : vector<2x32xf32>
      %cst_21 = arith.constant 0.000000e+00 : f32
      %49 = vector.broadcast %cst_21 : f32 to vector<2x32xf32>
      %50 = arith.subf %49, %48 : vector<2x32xf32>
      %51 = math.exp %50 : vector<2x32xf32>
      %cst_22 = arith.constant 0.000000e+00 : f32
      %52 = vector.broadcast %cst_22 : f32 to vector<2x32xf32>
      %53 = arith.maximumf %47, %52 : vector<2x32xf32>
      %54 = arith.mulf %47, %12 : vector<2x32xf32>
      %55 = arith.subf %53, %54 : vector<2x32xf32>
      %56 = math.log1p %51 : vector<2x32xf32>
      %57 = arith.addf %55, %56 : vector<2x32xf32>
      %cst_23 = arith.constant 1.000000e+00 : f32
      %58 = vector.broadcast %cst_23 : f32 to vector<2x32xf32>
      %59 = arith.addf %58, %51 : vector<2x32xf32>
      %60 = tpu.reciprocal %59 {approx = true} : vector<2x32xf32> -> vector<2x32xf32>
      %cst_24 = arith.constant 0.000000e+00 : f32
      %61 = vector.broadcast %cst_24 : f32 to vector<2x32xf32>
      %62 = arith.cmpf oge, %47, %61 : vector<2x32xf32>
      %63 = arith.mulf %51, %60 : vector<2x32xf32>
      %64 = arith.select %62, %60, %63 : vector<2x32xi1>, vector<2x32xf32>
      %cst_25 = arith.constant 1.000000e+00 : f32
      %65 = vector.broadcast %cst_25 : f32 to vector<2x32xf32>
      %66 = arith.subf %65, %64 : vector<2x32xf32>
      %cst_26 = arith.constant 2.500000e-01 : f32
      %67 = vector.broadcast %cst_26 : f32 to vector<2x32xf32>
      %68 = arith.mulf %12, %67 : vector<2x32xf32>
      %69 = arith.mulf %66, %66 : vector<2x32xf32>
      %70 = arith.mulf %68, %69 : vector<2x32xf32>
      %71 = arith.mulf %70, %57 : vector<2x32xf32>
      %cst_27 = arith.constant 1.000000e+00 : f32
      %72 = vector.broadcast %cst_27 : f32 to vector<2x32xf32>
      %73 = arith.subf %72, %12 : vector<2x32xf32>
      %74 = arith.mulf %64, %64 : vector<2x32xf32>
      %75 = arith.mulf %73, %74 : vector<2x32xf32>
      %76 = arith.mulf %75, %57 : vector<2x32xf32>
      %77 = arith.addf %71, %76 : vector<2x32xf32>
      %78 = vector.shape_cast %77 : vector<2x32xf32> to vector<1x2x32xf32>
      %cst_28 = arith.constant dense<0.000000e+00> : vector<1xf32>
      %79 = vector.multi_reduction <add>, %78, %cst_28 [1, 2] : vector<1x2x32xf32> to vector<1xf32>
      %80 = vector.shape_cast %79 : vector<1xf32> to vector<1x1x1xf32>
      %81 = vector.extract %80[0, 0, 0] : f32 from vector<1x1x1xf32>
      %cst_29 = arith.constant 1.000000e+00 : f32
      %82 = arith.mulf %cst_29, %46 : f32
      %cst_30 = arith.constant 1.000000e+00 : f32
      %83 = arith.mulf %cst_30, %81 : f32
      %84 = arith.addf %82, %83 : f32
      %cst_31 = arith.constant 1.562500e-02 : f32
      %85 = arith.mulf %84, %cst_31 : f32
      %86 = vector.broadcast %85 : f32 to vector<1x8x128xf32>
      %c0_32 = arith.constant 0 : index
      %c0_33 = arith.constant 0 : index
      %c0_34 = arith.constant 0 : index
      %87 = vector.load %arg5[%c0_32, %c0_33, %c0_34] : memref<1x8x128xf32, #tpu.memory_space<vmem>>, vector<1x8x128xf32>
      tpu.vector_store %arg5[%c0_32, %c0_33, %c0_34], %86 {strides = array<i32>} : memref<1x8x128xf32, #tpu.memory_space<vmem>>, vector<1x8x128xf32>,
    } else {
    }
    return
  }
  func.func @transform_0(%arg0: i32, %arg1: i32) -> (i32, i32) {
    %c0_i32 = arith.constant 0 : i32
    %c0_i32_0 = arith.constant 0 : i32
    return %arg0, %c0_i32 : i32, i32
  }
  func.func @transform_1(%arg0: i32, %arg1: i32) -> (i32, i32) {
    %c0_i32 = arith.constant 0 : i32
    %c0_i32_0 = arith.constant 0 : i32
    return %arg0, %c0_i32 : i32, i32
  }
  func.func @transform_2(%arg0: i32, %arg1: i32) -> (i32, i32, i32) {
    %c0_i32 = arith.constant 0 : i32
    %c0_i32_0 = arith.constant 0 : i32
    return %arg0, %arg1, %c0_i32 : i32, i32, i32
  }
  func.func @transform_3(%arg0: i32, %arg1: i32) -> (i32, i32, i32) {
    %c0_i32 = arith.constant 0 : i32
    %c0_i32_0 = arith.constant 0 : i32
    %c0_i32_1 = arith.constant 0 : i32
    return %arg0, %c0_i32, %c0_i32_0 : i32, i32, i32
  }
}

</mosaic_0001>

<llo_original>
// kernel: tpu_custom_call.1
$region0: #{tpu_custom_call.1}
  #allocation0 [shape = 'u32[]', space=smem, size = 0x4, offset = 0x4, fixed_abs, tag = 'smem constant byte address 0x4 - core index']
  #allocation1 [shape = 'u32[144,128]{1,0:T(1,128)}', space=vmem, size = 0x12000, scoped, tag = 'internal scratch']
  #allocation2 [shape = 'f32[2,32]{1,0:T(2,128)}', space=vmem, size = 0x400, scoped, tag = 'scratch operand']
  %s0 = inlined_call_operand.hbm [shape: f32[2,32], index: 0, kind: input, shape index: {}]
  %s1 = inlined_call_operand.vmem [shape: f32[2,32], index: 1, kind: input, shape index: {}]
  %s2 = inlined_call_operand.hbm [shape: f32[2,8,32], index: 2, kind: input, shape index: {}]
  %s3 = inlined_call_operand.hbm [shape: f32[1,8,128], index: 3, kind: output, shape index: {}]
  %s4 = sld [smem:[#allocation0]]
  $region42: #{tpu_custom_call.1} parent=0
    _
  %s6 = ssub.s32 1, %s4
  %s7 = scalar_select 0, %s6, %s4
  $region1: #{tpu_custom_call.1} parent=0
    #allocation3 [shape = 'u8[1024]{0}', space=vmem, size = 0x400, scoped, tag = 'input window, operand 0, single buffered']
    #allocation4 [shape = 's32[1]{0}', space=sflag, size = 0x4, scoped, tag = 'scoped memory for tpu_custom_call.1']
    #allocation5 [shape = 's32[1]{0}', space=sflag, size = 0x4, scoped, tag = 'scoped memory for tpu_custom_call.1']
    #allocation6 [shape = 'u8[8192]{0}', space=vmem, size = 0x2000, scoped, tag = 'input window, operand 2, single buffered']
    #allocation7 [shape = 's32[1]{0}', space=sflag, size = 0x4, scoped, tag = 'scoped memory for tpu_custom_call.1']
    #allocation8 [shape = 'u8[4096]{0}', space=vmem, size = 0x1000, scoped, tag = 'output window, operand 0, single buffered']
    %8 = vsyncpa [#allocation4], 0
    %9 = vsyncpa [#allocation7], 0
    %10 = vsyncpa [#allocation5], 0
    // Predicated region
    $region2: #{tpu_custom_call.1} parent=1 // pred_check
      _
    $region3: #{tpu_custom_call.1} parent=1 // pred_check_branch
      %12 = sbr.rel (0) target = $region5
    $region4: #{tpu_custom_call.1} parent=1 // pred_region
      %s14 = ssub.s32 32, 32
      %15 = vsyncadd [#allocation4], %s14
      %s17 = sshll.u32 [#allocation3], 4
      %s18 = int_to_ptr.vmem [resolvable:$true] %s17
      %20 = dma.hbm_to_vmem [thread:$0]  %s0, 32, %s18, [#allocation4]
    $region5: #{tpu_custom_call.1} parent=1 // pred_fallthru
      _
    // Predicated region
    $region6: #{tpu_custom_call.1} parent=1 // pred_check
      _
    $region7: #{tpu_custom_call.1} parent=1 // pred_check_branch
      %22 = sbr.rel (0) target = $region9
    $region8: #{tpu_custom_call.1} parent=1 // pred_region
      _
    $region9: #{tpu_custom_call.1} parent=1 // pred_fallthru
      _
    // Predicated region
    $region10: #{tpu_custom_call.1} parent=1 // pred_check
      _
    $region11: #{tpu_custom_call.1} parent=1 // pred_check_branch
      %24 = sbr.rel (0) target = $region13
    $region12: #{tpu_custom_call.1} parent=1 // pred_region
      %s26 = ssub.s32 256, 256
      %27 = vsyncadd [#allocation7], %s26
      %s28 = sshll.u32 [#allocation6], 4
      %s29 = int_to_ptr.vmem [resolvable:$true] %s28
      %34 = dma.hbm_to_vmem [thread:$0]  %s2, 256, %s29, [#allocation7], 128, 128, 8
    $region13: #{tpu_custom_call.1} parent=1 // pred_fallthru
      _
    // Predicated region
    $region14: #{tpu_custom_call.1} parent=1 // pred_check
      _
    $region15: #{tpu_custom_call.1} parent=1 // pred_check_branch
      %36 = sbr.rel (0) target = $region17
    $region16: #{tpu_custom_call.1} parent=1 // pred_region
      %37 = dma.done [#allocation4], 32
    $region17: #{tpu_custom_call.1} parent=1 // pred_fallthru
      _
    // Predicated region
    $region18: #{tpu_custom_call.1} parent=1 // pred_check
      _
    $region19: #{tpu_custom_call.1} parent=1 // pred_check_branch
      %39 = sbr.rel (0) target = $region21
    $region20: #{tpu_custom_call.1} parent=1 // pred_region
      %40 = dma.done [#allocation7], 256
    $region21: #{tpu_custom_call.1} parent=1 // pred_fallthru
      _
    %v41 = vld [vmem:[#allocation6] sm:$0xff]
    %v42 = vld [vmem:[#allocation6 + $0x8] sm:$0xff]
    %vm43 = vcmask 261120
    %v44 = vsel %vm43, %v41, -inf
    %v45 = vrot.slane %v44, 4
    %v46 = vmax.f32 %v44, %v45
    %v47 = vrot.slane %v46, 2
    %v48 = vmax.f32 %v46, %v47
    %v49 = vrot.slane %v48, 1
    %v50 = vmax.f32 %v48, %v49
    %v51 = vsel %vm43, %v42, -inf
    %v52 = vrot.slane %v51, 4
    %v53 = vmax.f32 %v51, %v52
    %v54 = vrot.slane %v53, 2
    %v55 = vmax.f32 %v53, %v54
    %v56 = vrot.slane %v55, 1
    %v57 = vmax.f32 %v55, %v56
    %p58 = scmp.eq.s32.totalorder 0, 0
    // Predicated region
    $region22: #{tpu_custom_call.1} parent=1 // pred_check
      %p59 = pneg %p58
    $region23: #{tpu_custom_call.1} parent=1 // pred_check_branch
      %61 = sbr.rel (%p59) target = $region25
    $region24: #{tpu_custom_call.1} parent=1 // pred_region
      %vm64 = vcmask 1041409
      %v65 = vsel %vm64, %v57, %v50
      %vm67 = vcmask 254976
      %68 = vst.msk [vmem:[#allocation2] sm:$0x3] %vm67, %v65
    $region25: #{tpu_custom_call.1} parent=1 // pred_fallthru
      _
    %p69 = scmp.gt.s32.totalorder 0, 0
    // Predicated region
    $region26: #{tpu_custom_call.1} parent=1 // pred_check
      %p70 = pneg %p69
    $region27: #{tpu_custom_call.1} parent=1 // pred_check_branch
      %72 = sbr.rel (%p70) target = $region29
    $region28: #{tpu_custom_call.1} parent=1 // pred_region
      %v73 = vld [vmem:[#allocation2] sm:$0x3]
      %vm76 = vcmask 1041409
      %v77 = vsel %vm76, %v57, %v50
      %v79 = vmax.f32 %v73, %v77
      %vm80 = vcmask 254976
      %81 = vst.msk [vmem:[#allocation2] sm:$0x3] %vm80, %v79
    $region29: #{tpu_custom_call.1} parent=1 // pred_fallthru
      _
    // Predicated region
    $region30: #{tpu_custom_call.1} parent=1 // pred_check
      %p82 = pneg %p58
    $region31: #{tpu_custom_call.1} parent=1 // pred_check_branch
      %84 = sbr.rel (%p82) target = $region33
    $region32: #{tpu_custom_call.1} parent=1 // pred_region
      %v85 = vld [vmem:[#allocation3] sm:$0x3]
      %v86 = vld [vmem:[%s1] sm:$0x3]
      %v87 = vand.u32 2147483647, %v85
      %v88 = vsub.f32 0.0, %v87
      %v89 = vmul.f32 %v88, 1.442695
      %v90 = vpow.pop %v89
      %v91 = vmax.f32 %v85, 0.0
      %v92 = vmul.f32 %v85, %v86
      %v93 = vsub.f32 %v91, %v92
      %v94 = vadd.f32 %v90, 1.0
      %v95 = vlog2.pop %v94
      %v96 = vmul.f32 %v95, 0.6931472
      %v97 = vmul.f32 -0.5, %v90
      %v98 = vadd.f32 %v97, 1.0
      %v99 = vmul.f32 %v98, %v90
      %v100 = vand.u32 2147483647, %v90
      %vm101 = vcmp.lt.f32.partialorder %v100, 0.0004427343
      %v102 = vsel %vm101, %v99, %v96
      %v103 = vadd.f32 %v93, %v102
      %v104 = vadd.f32 %v90, 1.0
      %v105 = vrcp.pop %v104
      %vm106 = vcmp.ge.f32.partialorder %v85, 0.0
      %v107 = vmul.f32 %v90, %v105
      %v108 = vsel %vm106, %v105, %v107
      %v109 = vsub.f32 1.0, %v108
      %v110 = vmul.f32 %v86, 0.25
      %v111 = vmul.f32 %v109, %v109
      %v112 = vmul.f32 %v110, %v111
      %v113 = vmul.f32 %v112, %v103
      %v114 = vsub.f32 1.0, %v86
      %v115 = vmul.f32 %v108, %v108
      %v116 = vmul.f32 %v114, %v115
      %v117 = vmul.f32 %v116, %v103
      %v118 = vadd.f32 %v113, %v117
      %vm119 = vcmask 254976
      %v120 = vsel %vm119, %v118, 0.0
      %121 = vadd.xlane.f32.xlu0 %v120
      %v122 = vpop.xlane.xlu0 %121
      %v123 = vrot.slane %v122, 4
      %v124 = vadd.f32 %v122, %v123
      %v125 = vrot.slane %v124, 2
      %v126 = vadd.f32 %v124, %v125
      %v127 = vrot.slane %v126, 1
      %v128 = vadd.f32 %v126, %v127
      %s129 = vtos %v128
      %v130 = vld [vmem:[#allocation2] sm:$0x3]
      %v131 = vand.u32 2147483647, %v130
      %v132 = vsub.f32 0.0, %v131
      %v133 = vmul.f32 %v132, 1.442695
      %v134 = vpow.pop %v133
      %v135 = vmax.f32 %v130, 0.0
      %v136 = vmul.f32 %v130, %v86
      %v137 = vsub.f32 %v135, %v136
      %v138 = vadd.f32 %v134, 1.0
      %v139 = vlog2.pop %v138
      %v140 = vmul.f32 %v139, 0.6931472
      %v141 = vmul.f32 -0.5, %v134
      %v142 = vadd.f32 %v141, 1.0
      %v143 = vmul.f32 %v142, %v134
      %v144 = vand.u32 2147483647, %v134
      %vm145 = vcmp.lt.f32.partialorder %v144, 0.0004427343
      %v146 = vsel %vm145, %v143, %v140
      %v147 = vadd.f32 %v137, %v146
      %v148 = vadd.f32 %v134, 1.0
      %v149 = vrcp.pop %v148
      %vm150 = vcmp.ge.f32.partialorder %v130, 0.0
      %v151 = vmul.f32 %v134, %v149
      %v152 = vsel %vm150, %v149, %v151
      %v153 = vsub.f32 1.0, %v152
      %v154 = vmul.f32 %v153, %v153
      %v155 = vmul.f32 %v110, %v154
      %v156 = vmul.f32 %v155, %v147
      %v157 = vmul.f32 %v152, %v152
      %v158 = vmul.f32 %v114, %v157
      %v159 = vmul.f32 %v158, %v147
      %v160 = vadd.f32 %v156, %v159
      %v161 = vsel %vm119, %v160, 0.0
      %162 = vadd.xlane.f32.xlu0 %v161
      %v163 = vpop.xlane.xlu0 %162
      %v164 = vrot.slane %v163, 4
      %v165 = vadd.f32 %v163, %v164
      %v166 = vrot.slane %v165, 2
      %v167 = vadd.f32 %v165, %v166
      %v168 = vrot.slane %v167, 1
      %v169 = vadd.f32 %v167, %v168
      %s170 = vtos %v169
      %s171 = sadd.f32 %s129, %s170
      %s172 = smul.f32 %s171, 0.015625
      %v173 = vstv %s172
      %174 = vst [vmem:[#allocation8] sm:$0xff] %v173
    $region33: #{tpu_custom_call.1} parent=1 // pred_fallthru
      _
    // Predicated region
    $region34: #{tpu_custom_call.1} parent=1 // pred_check
      _
    $region35: #{tpu_custom_call.1} parent=1 // pred_check_branch
      %176 = sbr.rel (0) target = $region37
    $region36: #{tpu_custom_call.1} parent=1 // pred_region
      %s178 = ssub.s32 128, 128
      %179 = vsyncadd [#allocation5], %s178
      %s181 = sshll.u32 [#allocation8], 4
      %s182 = int_to_ptr.vmem [resolvable:$true] %s181
      %184 = dma.vmem_to_hbm [thread:$0]  %s182, 128, %s3, [#allocation5]
    $region37: #{tpu_custom_call.1} parent=1 // pred_fallthru
      _
    // Predicated region
    $region38: #{tpu_custom_call.1} parent=1 // pred_check
      _
    $region39: #{tpu_custom_call.1} parent=1 // pred_check_branch
      %186 = sbr.rel (0) target = $region41
    $region40: #{tpu_custom_call.1} parent=1 // pred_region
      %187 = dma.done [#allocation5], 128
    $region41: #{tpu_custom_call.1} parent=1 // pred_fallthru
      _
    %188 = vsyncpa [#allocation4], 1
    %189 = vsyncpa [#allocation7], 1
    %190 = vsyncpa [#allocation5], 1

</llo_original>
